<compile_context>
chip_gen: v7x
topology: tpu7x:2x2x1
jax: 0.10.0
libtpu: 0.0.40
codegen_flags: <defaults>
</compile_context>

<pallas_src>
import functools

import jax
import jax.numpy as jnp
from jax.experimental import pallas as pl
from jax.experimental.pallas import tpu as pltpu


def _hyper_kernel(z0_ref, w0_ref, b0_ref, w1_ref, b1_ref,
                  wa_ref, ba_ref, wb_ref, bb_ref, out_ref):
    """Single-step fused hypernetwork forward.

    z1  = relu(relu(z0 @ w0 + b0) @ w1 + b1)             (B, H)
    h   = relu(z1 @ wa_fused + ba_fused)                  (B, L*H)
    out = h @ wb_blockdiag + bb_fused                     (B, L*D)
    """
    h0 = jnp.maximum(
        jnp.dot(z0_ref[...], w0_ref[...],
                preferred_element_type=jnp.float32) + b0_ref[...], 0.0)
    z1 = jnp.maximum(
        jnp.dot(h0, w1_ref[...],
                preferred_element_type=jnp.float32) + b1_ref[...], 0.0)
    h = jnp.maximum(
        jnp.dot(z1, wa_ref[...],
                preferred_element_type=jnp.float32) + ba_ref[...], 0.0)
    out_ref[...] = (jnp.dot(h, wb_ref[...],
                            preferred_element_type=jnp.float32) + bb_ref[...])


def hypernetwork_forward(batch_z, params, *, n_qubits, n_layers,
                         n_output_dim_each_layer, qnn_type):
    """Pallas-backed equivalent of Hypernetwork.forward."""
    w0, b0, w1, b1, wa, ba, wb, bb = params
    B, n_ham = batch_z.shape
    H = w0.shape[1]
    D = n_output_dim_each_layer
    L = n_layers

    # --- wrapper-side layer fusion (layout plumbing, traced once by XLA) ---
    # Per-layer first matmul fused along the lane axis: (L,H,H) -> (H, L*H)
    wa_f = jnp.transpose(wa, (1, 0, 2)).reshape(H, L * H)
    ba_f = jnp.transpose(ba, (1, 0, 2)).reshape(1, L * H)
    # Per-layer second matmul fused as a block-diagonal weight: (L,H,D) -> (L*H, L*D)
    eye = jnp.eye(L, dtype=wb.dtype)
    wb_blk = jnp.einsum('lk,lhd->lhkd', eye, wb).reshape(L * H, L * D)
    bb_f = jnp.transpose(bb, (1, 0, 2)).reshape(1, L * D)

    # Advisory cost estimate (the call is overhead-dominated at these shapes).
    flops = 2 * B * (n_ham * H + H * H + H * (L * H) + (L * H) * (L * D))
    bytes_accessed = 4 * (batch_z.size + w0.size + b0.size + w1.size + b1.size
                          + wa_f.size + ba_f.size + wb_blk.size + bb_f.size
                          + B * L * D)

    out_flat = pl.pallas_call(
        _hyper_kernel,
        out_shape=jax.ShapeDtypeStruct((B, L * D), jnp.float32),
        in_specs=[pl.BlockSpec(memory_space=pltpu.MemorySpace.VMEM)] * 9,
        out_specs=pl.BlockSpec(memory_space=pltpu.MemorySpace.VMEM),
        cost_estimate=pl.CostEstimate(flops=flops, transcendentals=0,
                                      bytes_accessed=bytes_accessed),
    )(batch_z, w0, b0, w1, b1, wa_f, ba_f, wb_blk, bb_f)

    # out_flat columns are layer-major: column l*D + d == layer l, output d.
    # This already equals torch.stack(...).permute(1, 0, 2) reshaped to (B, L*D).
    if qnn_type == 'QAOA':
        return jnp.transpose(out_flat.reshape(B, L, D), (0, 2, 1))   # (B, D, L)
    elif qnn_type == 'HEA':
        return out_flat.reshape(-1, n_layers, n_qubits, 3)           # (B, L, nq, 3)
    return jnp.transpose(out_flat.reshape(B, L, D), (1, 0, 2))       # (L, B, D)


def init_params(key, n_ham, mlp_hidden_dim, n_layers, n_output_dim):
    """Deterministic synthetic init (matches nn.Linear shapes, (in,out) layout)."""
    H, D, L = mlp_hidden_dim, n_output_dim, n_layers
    ks = jax.random.split(key, 8)
    scale = 0.1
    w0 = scale * jax.random.normal(ks[0], (n_ham, H), jnp.float32)
    b0 = scale * jax.random.normal(ks[1], (1, H), jnp.float32)
    w1 = scale * jax.random.normal(ks[2], (H, H), jnp.float32)
    b1 = scale * jax.random.normal(ks[3], (1, H), jnp.float32)
    wa = scale * jax.random.normal(ks[4], (L, H, H), jnp.float32)
    ba = scale * jax.random.normal(ks[5], (L, 1, H), jnp.float32)
    wb = scale * jax.random.normal(ks[6], (L, H, D), jnp.float32)
    bb = scale * jax.random.normal(ks[7], (L, 1, D), jnp.float32)
    return (w0, b0, w1, b1, wa, ba, wb, bb)


def reference_forward(batch_z, params, *, n_qubits, n_layers,
                      n_output_dim_each_layer, qnn_type):
    """Pure-JAX reference mirroring the PyTorch forward."""
    w0, b0, w1, b1, wa, ba, wb, bb = params
    z1 = jax.nn.relu(jax.nn.relu(batch_z @ w0 + b0) @ w1 + b1)
    outs = []
    for l in range(n_layers):
        h = jax.nn.relu(z1 @ wa[l] + ba[l])
        outs.append(h @ wb[l] + bb[l])
    stacked = jnp.stack(outs)                                    # (L, B, D)
    if qnn_type == 'QAOA':
        return jnp.transpose(stacked, (1, 2, 0))
    elif qnn_type == 'HEA':
        return jnp.transpose(stacked, (1, 0, 2)).reshape(
            -1, n_layers, n_qubits, 3)
    return stacked


if __name__ == "__main__":
    # Small, self-consistent configuration (HEA => output dim = n_qubits * 3).
    n_qubits = 4
    n_layers = 3
    n_ham = 16
    mlp_hidden_dim = 32
    qnn_type = 'HEA'
    n_output_dim_each_layer = n_qubits * 3   # 12
    batch = 2

    key = jax.random.PRNGKey(0)
    k_x, k_p = jax.random.split(key)
    batch_z = jax.random.normal(k_x, (batch, n_ham), jnp.float32)
    params = init_params(k_p, n_ham, mlp_hidden_dim, n_layers,
                         n_output_dim_each_layer)

    fwd = functools.partial(hypernetwork_forward,
                            n_qubits=n_qubits, n_layers=n_layers,
                            n_output_dim_each_layer=n_output_dim_each_layer,
                            qnn_type=qnn_type)
    out = jax.jit(lambda z: fwd(z, params))(batch_z)
    out = jax.block_until_ready(out)

    ref = reference_forward(batch_z, params, n_qubits=n_qubits,
                            n_layers=n_layers,
                            n_output_dim_each_layer=n_output_dim_each_layer,
                            qnn_type=qnn_type)
    assert out.shape == (batch, n_layers, n_qubits, 3), out.shape
    assert jnp.allclose(out, ref, atol=1e-5, rtol=1e-5), "mismatch vs reference"

    # Also sanity-check the QAOA layout path.
    out_qaoa = jax.jit(lambda z: hypernetwork_forward(
        z, params, n_qubits=n_qubits, n_layers=n_layers,
        n_output_dim_each_layer=n_output_dim_each_layer,
        qnn_type='QAOA'))(batch_z)
    ref_qaoa = reference_forward(batch_z, params, n_qubits=n_qubits,
                                 n_layers=n_layers,
                                 n_output_dim_each_layer=n_output_dim_each_layer,
                                 qnn_type='QAOA')
    assert jnp.allclose(jax.block_until_ready(out_qaoa), ref_qaoa,
                        atol=1e-5, rtol=1e-5), "QAOA mismatch vs reference"

    print("KERNEL_OK")
</pallas_src>

<mosaic_0001>
module attributes {stable_mosaic.version = 11 : i64} {
  func.func @_hyper_kernel(%arg0: memref<2x16xf32, #tpu.memory_space<vmem>>, %arg1: memref<16x32xf32, #tpu.memory_space<vmem>>, %arg2: memref<1x32xf32, #tpu.memory_space<vmem>>, %arg3: memref<32x32xf32, #tpu.memory_space<vmem>>, %arg4: memref<1x32xf32, #tpu.memory_space<vmem>>, %arg5: memref<32x96xf32, #tpu.memory_space<vmem>>, %arg6: memref<1x96xf32, #tpu.memory_space<vmem>>, %arg7: memref<96x36xf32, #tpu.memory_space<vmem>>, %arg8: memref<1x36xf32, #tpu.memory_space<vmem>>, %arg9: memref<2x36xf32, #tpu.memory_space<vmem>>) attributes {dimension_semantics = [], scalar_prefetch = 0 : i64, scratch_operands = 0 : i64, tpu.core_type = #tpu.core_type<tc>} {
    %c0 = arith.constant 0 : index
    %c0_0 = arith.constant 0 : index
    %0 = vector.load %arg0[%c0, %c0_0] : memref<2x16xf32, #tpu.memory_space<vmem>>, vector<2x16xf32>
    %c0_1 = arith.constant 0 : index
    %c0_2 = arith.constant 0 : index
    %1 = vector.load %arg1[%c0_1, %c0_2] : memref<16x32xf32, #tpu.memory_space<vmem>>, vector<16x32xf32>
    %cst = arith.constant dense<0.000000e+00> : vector<2x32xf32>
    %2 = tpu.matmul %0, %1, %cst {dimension_numbers = #tpu.dot_dimension_numbers<[1], [0], [0], [1], [0, 0, 1, 1], [], []>} : vector<2x16xf32>, vector<16x32xf32>, vector<2x32xf32> -> vector<2x32xf32>
    %c0_3 = arith.constant 0 : index
    %c0_4 = arith.constant 0 : index
    %3 = vector.load %arg2[%c0_3, %c0_4] : memref<1x32xf32, #tpu.memory_space<vmem>>, vector<1x32xf32>
    %4 = vector.broadcast %3 : vector<1x32xf32> to vector<2x32xf32>
    %5 = arith.addf %2, %4 : vector<2x32xf32>
    %cst_5 = arith.constant 0.000000e+00 : f32
    %6 = vector.broadcast %cst_5 : f32 to vector<2x32xf32>
    %7 = arith.maximumf %5, %6 : vector<2x32xf32>
    %c0_6 = arith.constant 0 : index
    %c0_7 = arith.constant 0 : index
    %8 = vector.load %arg3[%c0_6, %c0_7] : memref<32x32xf32, #tpu.memory_space<vmem>>, vector<32x32xf32>
    %cst_8 = arith.constant dense<0.000000e+00> : vector<2x32xf32>
    %9 = tpu.matmul %7, %8, %cst_8 {dimension_numbers = #tpu.dot_dimension_numbers<[1], [0], [0], [1], [0, 0, 1, 1], [], []>} : vector<2x32xf32>, vector<32x32xf32>, vector<2x32xf32> -> vector<2x32xf32>
    %c0_9 = arith.constant 0 : index
    %c0_10 = arith.constant 0 : index
    %10 = vector.load %arg4[%c0_9, %c0_10] : memref<1x32xf32, #tpu.memory_space<vmem>>, vector<1x32xf32>
    %11 = vector.broadcast %10 : vector<1x32xf32> to vector<2x32xf32>
    %12 = arith.addf %9, %11 : vector<2x32xf32>
    %cst_11 = arith.constant 0.000000e+00 : f32
    %13 = vector.broadcast %cst_11 : f32 to vector<2x32xf32>
    %14 = arith.maximumf %12, %13 : vector<2x32xf32>
    %c0_12 = arith.constant 0 : index
    %c0_13 = arith.constant 0 : index
    %15 = vector.load %arg5[%c0_12, %c0_13] : memref<32x96xf32, #tpu.memory_space<vmem>>, vector<32x96xf32>
    %cst_14 = arith.constant dense<0.000000e+00> : vector<2x96xf32>
    %16 = tpu.matmul %14, %15, %cst_14 {dimension_numbers = #tpu.dot_dimension_numbers<[1], [0], [0], [1], [0, 0, 1, 1], [], []>} : vector<2x32xf32>, vector<32x96xf32>, vector<2x96xf32> -> vector<2x96xf32>
    %c0_15 = arith.constant 0 : index
    %c0_16 = arith.constant 0 : index
    %17 = vector.load %arg6[%c0_15, %c0_16] : memref<1x96xf32, #tpu.memory_space<vmem>>, vector<1x96xf32>
    %18 = vector.broadcast %17 : vector<1x96xf32> to vector<2x96xf32>
    %19 = arith.addf %16, %18 : vector<2x96xf32>
    %cst_17 = arith.constant 0.000000e+00 : f32
    %20 = vector.broadcast %cst_17 : f32 to vector<2x96xf32>
    %21 = arith.maximumf %19, %20 : vector<2x96xf32>
    %c0_18 = arith.constant 0 : index
    %c0_19 = arith.constant 0 : index
    %22 = vector.load %arg7[%c0_18, %c0_19] : memref<96x36xf32, #tpu.memory_space<vmem>>, vector<96x36xf32>
    %cst_20 = arith.constant dense<0.000000e+00> : vector<2x36xf32>
    %23 = tpu.matmul %21, %22, %cst_20 {dimension_numbers = #tpu.dot_dimension_numbers<[1], [0], [0], [1], [0, 0, 1, 1], [], []>} : vector<2x96xf32>, vector<96x36xf32>, vector<2x36xf32> -> vector<2x36xf32>
    %c0_21 = arith.constant 0 : index
    %c0_22 = arith.constant 0 : index
    %24 = vector.load %arg8[%c0_21, %c0_22] : memref<1x36xf32, #tpu.memory_space<vmem>>, vector<1x36xf32>
    %25 = vector.broadcast %24 : vector<1x36xf32> to vector<2x36xf32>
    %26 = arith.addf %23, %25 : vector<2x36xf32>
    %c0_23 = arith.constant 0 : index
    %c0_24 = arith.constant 0 : index
    %27 = vector.load %arg9[%c0_23, %c0_24] : memref<2x36xf32, #tpu.memory_space<vmem>>, vector<2x36xf32>
    tpu.vector_store %arg9[%c0_23, %c0_24], %26 {strides = array<i32>} : memref<2x36xf32, #tpu.memory_space<vmem>>, vector<2x36xf32>,
    return
  }
}

</mosaic_0001>

<llo_original>
// kernel: _lambda_.1
$region0: #{_lambda_.1}
  #allocation0 [shape = 'u32[]', space=smem, size = 0x4, offset = 0x4, fixed_abs, tag = 'smem constant byte address 0x4 - core index']
  #allocation1 [shape = 'u32[144,128]{1,0:T(1,128)}', space=vmem, size = 0x12000, scoped, tag = 'internal scratch']
  %s0 = inlined_call_operand.vmem [shape: f32[2,16], index: 0, kind: input, shape index: {}]
  %s1 = inlined_call_operand.vmem [shape: f32[16,32], index: 1, kind: input, shape index: {}]
  %s2 = inlined_call_operand.vmem [shape: f32[1,32], index: 2, kind: input, shape index: {}]
  %s3 = inlined_call_operand.vmem [shape: f32[32,32], index: 3, kind: input, shape index: {}]
  %s4 = inlined_call_operand.vmem [shape: f32[1,32], index: 4, kind: input, shape index: {}]
  %s5 = inlined_call_operand.vmem [shape: f32[32,96], index: 5, kind: input, shape index: {}]
  %s6 = inlined_call_operand.vmem [shape: f32[1,96], index: 6, kind: input, shape index: {}]
  %s7 = inlined_call_operand.vmem [shape: f32[96,36], index: 7, kind: input, shape index: {}]
  %s8 = inlined_call_operand.vmem [shape: f32[1,36], index: 8, kind: input, shape index: {}]
  %s9 = inlined_call_operand.vmem [shape: f32[2,36], index: 9, kind: output, shape index: {}]
  %s10 = sld [smem:[#allocation0]]
  $region46: #{_lambda_.1} parent=0
    _
  %s12 = ssub.s32 1, %s10
  %s13 = scalar_select 0, %s12, %s10
  // Predicated region
  $region2: #{_lambda_.1} parent=0 // pred_check
    _
  $region3: #{_lambda_.1} parent=0 // pred_check_branch
    %15 = sbr.rel (0) target = $region5
  $region4: #{_lambda_.1} parent=0 // pred_region
    _
  $region5: #{_lambda_.1} parent=0 // pred_fallthru
    _
  // Predicated region
  $region6: #{_lambda_.1} parent=0 // pred_check
    _
  $region7: #{_lambda_.1} parent=0 // pred_check_branch
    %17 = sbr.rel (0) target = $region9
  $region8: #{_lambda_.1} parent=0 // pred_region
    _
  $region9: #{_lambda_.1} parent=0 // pred_fallthru
    _
  // Predicated region
  $region10: #{_lambda_.1} parent=0 // pred_check
    _
  $region11: #{_lambda_.1} parent=0 // pred_check_branch
    %19 = sbr.rel (0) target = $region13
  $region12: #{_lambda_.1} parent=0 // pred_region
    _
  $region13: #{_lambda_.1} parent=0 // pred_fallthru
    _
  // Predicated region
  $region14: #{_lambda_.1} parent=0 // pred_check
    _
  $region15: #{_lambda_.1} parent=0 // pred_check_branch
    %21 = sbr.rel (0) target = $region17
  $region16: #{_lambda_.1} parent=0 // pred_region
    _
  $region17: #{_lambda_.1} parent=0 // pred_fallthru
    _
  // Predicated region
  $region18: #{_lambda_.1} parent=0 // pred_check
    _
  $region19: #{_lambda_.1} parent=0 // pred_check_branch
    %23 = sbr.rel (0) target = $region21
  $region20: #{_lambda_.1} parent=0 // pred_region
    _
  $region21: #{_lambda_.1} parent=0 // pred_fallthru
    _
  // Predicated region
  $region22: #{_lambda_.1} parent=0 // pred_check
    _
  $region23: #{_lambda_.1} parent=0 // pred_check_branch
    %25 = sbr.rel (0) target = $region25
  $region24: #{_lambda_.1} parent=0 // pred_region
    _
  $region25: #{_lambda_.1} parent=0 // pred_fallthru
    _
  // Predicated region
  $region26: #{_lambda_.1} parent=0 // pred_check
    _
  $region27: #{_lambda_.1} parent=0 // pred_check_branch
    %27 = sbr.rel (0) target = $region29
  $region28: #{_lambda_.1} parent=0 // pred_region
    _
  $region29: #{_lambda_.1} parent=0 // pred_fallthru
    _
  // Predicated region
  $region30: #{_lambda_.1} parent=0 // pred_check
    _
  $region31: #{_lambda_.1} parent=0 // pred_check_branch
    %29 = sbr.rel (0) target = $region33
  $region32: #{_lambda_.1} parent=0 // pred_region
    _
  $region33: #{_lambda_.1} parent=0 // pred_fallthru
    _
  // Predicated region
  $region34: #{_lambda_.1} parent=0 // pred_check
    _
  $region35: #{_lambda_.1} parent=0 // pred_check_branch
    %31 = sbr.rel (0) target = $region37
  $region36: #{_lambda_.1} parent=0 // pred_region
    _
  $region37: #{_lambda_.1} parent=0 // pred_fallthru
    _
  %v32 = vld [vmem:[%s0] sm:$0x3]
  %v33 = vld [vmem:[%s1] sm:$0xff]
  %v34 = vld [vmem:[%s1 + $0x8] sm:$0xff]
  %v35 = vld [vmem:[%s2] sm:$0x1]
  %v37 = vlaneseq
  %v38 = vshrl.u32 %v37, 7
  %v39 = vsub.s32 0, %v38
  %v40 = vrot.slane %v35, %v39
  %vm42 = vcmask 130048
  %v44 = vsel %vm42, %v32, 0
  %46 = vmatprep.subr.mxu0 0.0
  %47 = vmatpush1.msra.mxu0 %v33
  %48 = vmatprep.subr.mxu0 0.0
  %49 = vmatpush1.msra.mxu0 %v34
  %50 = vmatprep.subr.mxu0 0.0
  %51 = vmatpush1.msra.mxu0 0.0
  %52 = vmatprep.subr.mxu0 0.0
  %53 = vmatpush1.msra.mxu0 0.0
  %54 = vmatprep.subr.mxu0 0.0
  %55 = vmatpush1.msra.mxu0 0.0
  %56 = vmatprep.subr.mxu0 0.0
  %57 = vmatpush1.msra.mxu0 0.0
  %58 = vmatprep.subr.mxu0 0.0
  %59 = vmatpush1.msra.mxu0 0.0
  %60 = vmatprep.subr.mxu0 0.0
  %61 = vmatpush1.msra.mxu0 0.0
  %62 = vmatprep.subr.mxu0 0.0
  %63 = vmatpush1.msra.mxu0 0.0
  %64 = vmatprep.subr.mxu0 0.0
  %65 = vmatpush1.msra.mxu0 0.0
  %66 = vmatprep.subr.mxu0 0.0
  %67 = vmatpush1.msra.mxu0 0.0
  %68 = vmatprep.subr.mxu0 0.0
  %69 = vmatpush1.msra.mxu0 0.0
  %70 = vmatprep.subr.mxu0 0.0
  %71 = vmatpush1.msra.mxu0 0.0
  %72 = vmatprep.subr.mxu0 0.0
  %73 = vmatpush1.msra.mxu0 0.0
  %74 = vmatprep.subr.mxu0 0.0
  %75 = vmatpush1.msra.mxu0 0.0
  %76 = vmatprep.subr.mxu0 0.0
  %77 = vmatpush1.msra.mxu0 0.0
  %78 = vmatprep.subr.mxu0 0.0
  %79 = vmatpush1.msra.mxu0 0.0
  %80 = vmatprep.subr.mxu0 0.0
  %81 = vmatpush1.msra.mxu0 0.0
  %82 = vmatprep.subr.mxu0 0.0
  %83 = vmatpush1.msra.mxu0 0.0
  %84 = vmatprep.subr.mxu0 0.0
  %85 = vmatpush1.msra.mxu0 0.0
  %86 = vmatprep.subr.mxu0 0.0
  %87 = vmatpush1.msra.mxu0 0.0
  %88 = vmatprep.subr.mxu0 0.0
  %89 = vmatpush1.msra.mxu0 0.0
  %90 = vmatprep.subr.mxu0 0.0
  %91 = vmatpush1.msra.mxu0 0.0
  %92 = vmatprep.subr.mxu0 0.0
  %93 = vmatpush1.msra.mxu0 0.0
  %94 = vmatprep.subr.mxu0 0.0
  %95 = vmatpush1.msra.mxu0 0.0
  %96 = vmatprep.subr.mxu0 0.0
  %97 = vmatpush1.msra.mxu0 0.0
  %98 = vmatprep.subr.mxu0 0.0
  %99 = vmatpush1.msra.mxu0 0.0
  %100 = vmatprep.subr.mxu0 0.0
  %101 = vmatpush1.msra.mxu0 0.0
  %102 = vmatprep.subr.mxu0 0.0
  %103 = vmatpush1.msra.mxu0 0.0
  %104 = vmatprep.subr.mxu0 0.0
  %105 = vmatpush1.msra.mxu0 0.0
  %106 = vmatprep.subr.mxu0 0.0
  %107 = vmatpush1.msra.mxu0 0.0
  %108 = vmatprep.subr.mxu0 0.0
  %109 = vmatpush1.msra.mxu0 0.0
  %110 = vmatprep.mubr.f32.mxu0 0.0
  %111 = vmatmul.mubr.f32.gmra.mrb[0].mxu0 %v44
  %v112 = vpop.f32.mrb[0].mxu0
  %v113 = vadd.f32 %v40, %v112
  %v114 = vpop.f32.mrb[0].mxu0
  %115 = vdwg.mxu0
  %v116 = vmax.f32 %v113, 0.0
  %v117 = vld [vmem:[%s3] sm:$0xff]
  %v118 = vld [vmem:[%s3 + $0x8] sm:$0xff]
  %v119 = vld [vmem:[%s3 + $0x10] sm:$0xff]
  %v120 = vld [vmem:[%s3 + $0x18] sm:$0xff]
  %v121 = vld [vmem:[%s4] sm:$0x1]
  %v123 = vlaneseq
  %v124 = vshrl.u32 %v123, 7
  %v125 = vsub.s32 0, %v124
  %v126 = vrot.slane %v121, %v125
  %vm128 = vcmask 261120
  %v130 = vsel %vm128, %v116, 0
  %132 = vmatprep.subr.mxu0 0.0
  %133 = vmatpush1.msra.mxu0 %v117
  %134 = vmatprep.subr.mxu0 0.0
  %135 = vmatpush1.msra.mxu0 %v118
  %136 = vmatprep.subr.mxu0 0.0
  %137 = vmatpush1.msra.mxu0 %v119
  %138 = vmatprep.subr.mxu0 0.0
  %139 = vmatpush1.msra.mxu0 %v120
  %140 = vmatprep.subr.mxu0 0.0
  %141 = vmatpush1.msra.mxu0 0.0
  %142 = vmatprep.subr.mxu0 0.0
  %143 = vmatpush1.msra.mxu0 0.0
  %144 = vmatprep.subr.mxu0 0.0
  %145 = vmatpush1.msra.mxu0 0.0
  %146 = vmatprep.subr.mxu0 0.0
  %147 = vmatpush1.msra.mxu0 0.0
  %148 = vmatprep.subr.mxu0 0.0
  %149 = vmatpush1.msra.mxu0 0.0
  %150 = vmatprep.subr.mxu0 0.0
  %151 = vmatpush1.msra.mxu0 0.0
  %152 = vmatprep.subr.mxu0 0.0
  %153 = vmatpush1.msra.mxu0 0.0
  %154 = vmatprep.subr.mxu0 0.0
  %155 = vmatpush1.msra.mxu0 0.0
  %156 = vmatprep.subr.mxu0 0.0
  %157 = vmatpush1.msra.mxu0 0.0
  %158 = vmatprep.subr.mxu0 0.0
  %159 = vmatpush1.msra.mxu0 0.0
  %160 = vmatprep.subr.mxu0 0.0
  %161 = vmatpush1.msra.mxu0 0.0
  %162 = vmatprep.subr.mxu0 0.0
  %163 = vmatpush1.msra.mxu0 0.0
  %164 = vmatprep.subr.mxu0 0.0
  %165 = vmatpush1.msra.mxu0 0.0
  %166 = vmatprep.subr.mxu0 0.0
  %167 = vmatpush1.msra.mxu0 0.0
  %168 = vmatprep.subr.mxu0 0.0
  %169 = vmatpush1.msra.mxu0 0.0
  %170 = vmatprep.subr.mxu0 0.0
  %171 = vmatpush1.msra.mxu0 0.0
  %172 = vmatprep.subr.mxu0 0.0
  %173 = vmatpush1.msra.mxu0 0.0
  %174 = vmatprep.subr.mxu0 0.0
  %175 = vmatpush1.msra.mxu0 0.0
  %176 = vmatprep.subr.mxu0 0.0
  %177 = vmatpush1.msra.mxu0 0.0
  %178 = vmatprep.subr.mxu0 0.0
  %179 = vmatpush1.msra.mxu0 0.0
  %180 = vmatprep.subr.mxu0 0.0
  %181 = vmatpush1.msra.mxu0 0.0
  %182 = vmatprep.subr.mxu0 0.0
  %183 = vmatpush1.msra.mxu0 0.0
  %184 = vmatprep.subr.mxu0 0.0
  %185 = vmatpush1.msra.mxu0 0.0
  %186 = vmatprep.subr.mxu0 0.0
  %187 = vmatpush1.msra.mxu0 0.0
  %188 = vmatprep.subr.mxu0 0.0
  %189 = vmatpush1.msra.mxu0 0.0
  %190 = vmatprep.subr.mxu0 0.0
  %191 = vmatpush1.msra.mxu0 0.0
  %192 = vmatprep.subr.mxu0 0.0
  %193 = vmatpush1.msra.mxu0 0.0
  %194 = vmatprep.subr.mxu0 0.0
  %195 = vmatpush1.msra.mxu0 0.0
  %196 = vmatprep.mubr.f32.mxu0 0.0
  %197 = vmatmul.mubr.f32.gmra.mrb[0].mxu0 %v130
  %v198 = vpop.f32.mrb[0].mxu0
  %v199 = vadd.f32 %v126, %v198
  %v200 = vpop.f32.mrb[0].mxu0
  %201 = vdwg.mxu0
  %v202 = vmax.f32 %v199, 0.0
  %v203 = vld [vmem:[%s5] sm:$0xff]
  %v204 = vld [vmem:[%s5 + $0x8] sm:$0xff]
  %v205 = vld [vmem:[%s5 + $0x10] sm:$0xff]
  %v206 = vld [vmem:[%s5 + $0x18] sm:$0xff]
  %v207 = vld [vmem:[%s6] sm:$0x1]
  %v209 = vlaneseq
  %v210 = vshrl.u32 %v209, 7
  %v211 = vsub.s32 0, %v210
  %v212 = vrot.slane %v207, %v211
  %v215 = vsel %vm128, %v202, 0
  %217 = vmatprep.subr.mxu0 0.0
  %218 = vmatpush1.msra.mxu0 %v203
  %219 = vmatprep.subr.mxu0 0.0
  %220 = vmatpush1.msra.mxu0 %v204
  %221 = vmatprep.subr.mxu0 0.0
  %222 = vmatpush1.msra.mxu0 %v205
  %223 = vmatprep.subr.mxu0 0.0
  %224 = vmatpush1.msra.mxu0 %v206
  %225 = vmatprep.subr.mxu0 0.0
  %226 = vmatpush1.msra.mxu0 0.0
  %227 = vmatprep.subr.mxu0 0.0
  %228 = vmatpush1.msra.mxu0 0.0
  %229 = vmatprep.subr.mxu0 0.0
  %230 = vmatpush1.msra.mxu0 0.0
  %231 = vmatprep.subr.mxu0 0.0
  %232 = vmatpush1.msra.mxu0 0.0
  %233 = vmatprep.subr.mxu0 0.0
  %234 = vmatpush1.msra.mxu0 0.0
  %235 = vmatprep.subr.mxu0 0.0
  %236 = vmatpush1.msra.mxu0 0.0
  %237 = vmatprep.subr.mxu0 0.0
  %238 = vmatpush1.msra.mxu0 0.0
  %239 = vmatprep.subr.mxu0 0.0
  %240 = vmatpush1.msra.mxu0 0.0
  %241 = vmatprep.subr.mxu0 0.0
  %242 = vmatpush1.msra.mxu0 0.0
  %243 = vmatprep.subr.mxu0 0.0
  %244 = vmatpush1.msra.mxu0 0.0
  %245 = vmatprep.subr.mxu0 0.0
  %246 = vmatpush1.msra.mxu0 0.0
  %247 = vmatprep.subr.mxu0 0.0
  %248 = vmatpush1.msra.mxu0 0.0
  %249 = vmatprep.subr.mxu0 0.0
  %250 = vmatpush1.msra.mxu0 0.0
  %251 = vmatprep.subr.mxu0 0.0
  %252 = vmatpush1.msra.mxu0 0.0
  %253 = vmatprep.subr.mxu0 0.0
  %254 = vmatpush1.msra.mxu0 0.0
  %255 = vmatprep.subr.mxu0 0.0
  %256 = vmatpush1.msra.mxu0 0.0
  %257 = vmatprep.subr.mxu0 0.0
  %258 = vmatpush1.msra.mxu0 0.0
  %259 = vmatprep.subr.mxu0 0.0
  %260 = vmatpush1.msra.mxu0 0.0
  %261 = vmatprep.subr.mxu0 0.0
  %262 = vmatpush1.msra.mxu0 0.0
  %263 = vmatprep.subr.mxu0 0.0
  %264 = vmatpush1.msra.mxu0 0.0
  %265 = vmatprep.subr.mxu0 0.0
  %266 = vmatpush1.msra.mxu0 0.0
  %267 = vmatprep.subr.mxu0 0.0
  %268 = vmatpush1.msra.mxu0 0.0
  %269 = vmatprep.subr.mxu0 0.0
  %270 = vmatpush1.msra.mxu0 0.0
  %271 = vmatprep.subr.mxu0 0.0
  %272 = vmatpush1.msra.mxu0 0.0
  %273 = vmatprep.subr.mxu0 0.0
  %274 = vmatpush1.msra.mxu0 0.0
  %275 = vmatprep.subr.mxu0 0.0
  %276 = vmatpush1.msra.mxu0 0.0
  %277 = vmatprep.subr.mxu0 0.0
  %278 = vmatpush1.msra.mxu0 0.0
  %279 = vmatprep.subr.mxu0 0.0
  %280 = vmatpush1.msra.mxu0 0.0
  %281 = vmatprep.mubr.f32.mxu0 0.0
  %282 = vmatmul.mubr.f32.gmra.mrb[0].mxu0 %v215
  %v283 = vpop.f32.mrb[0].mxu0
  %v284 = vadd.f32 %v212, %v283
  %v285 = vpop.f32.mrb[0].mxu0
  %286 = vdwg.mxu0
  %v287 = vmax.f32 %v284, 0.0
  %v288 = vld [vmem:[%s7] sm:$0xff]
  %v289 = vld [vmem:[%s7 + $0x8] sm:$0xff]
  %v290 = vld [vmem:[%s7 + $0x10] sm:$0xff]
  %v291 = vld [vmem:[%s7 + $0x18] sm:$0xff]
  %v292 = vld [vmem:[%s7 + $0x20] sm:$0xff]
  %v293 = vld [vmem:[%s7 + $0x28] sm:$0xff]
  %v294 = vld [vmem:[%s7 + $0x30] sm:$0xff]
  %v295 = vld [vmem:[%s7 + $0x38] sm:$0xff]
  %v296 = vld [vmem:[%s7 + $0x40] sm:$0xff]
  %v297 = vld [vmem:[%s7 + $0x48] sm:$0xff]
  %v298 = vld [vmem:[%s7 + $0x50] sm:$0xff]
  %v299 = vld [vmem:[%s7 + $0x58] sm:$0xff]
  %v300 = vld [vmem:[%s8] sm:$0x1]
  %v302 = vlaneseq
  %v303 = vshrl.u32 %v302, 7
  %v304 = vsub.s32 0, %v303
  %v305 = vrot.slane %v300, %v304
  %vm307 = vcmask 785408
  %v309 = vsel %vm307, %v287, 0
  %311 = vmatprep.subr.mxu0 0.0
  %312 = vmatpush1.msra.mxu0 %v288
  %313 = vmatprep.subr.mxu0 0.0
  %314 = vmatpush1.msra.mxu0 %v289
  %315 = vmatprep.subr.mxu0 0.0
  %316 = vmatpush1.msra.mxu0 %v290
  %317 = vmatprep.subr.mxu0 0.0
  %318 = vmatpush1.msra.mxu0 %v291
  %319 = vmatprep.subr.mxu0 0.0
  %320 = vmatpush1.msra.mxu0 %v292
  %321 = vmatprep.subr.mxu0 0.0
  %322 = vmatpush1.msra.mxu0 %v293
  %323 = vmatprep.subr.mxu0 0.0
  %324 = vmatpush1.msra.mxu0 %v294
  %325 = vmatprep.subr.mxu0 0.0
  %326 = vmatpush1.msra.mxu0 %v295
  %327 = vmatprep.subr.mxu0 0.0
  %328 = vmatpush1.msra.mxu0 %v296
  %329 = vmatprep.subr.mxu0 0.0
  %330 = vmatpush1.msra.mxu0 %v297
  %331 = vmatprep.subr.mxu0 0.0
  %332 = vmatpush1.msra.mxu0 %v298
  %333 = vmatprep.subr.mxu0 0.0
  %334 = vmatpush1.msra.mxu0 %v299
  %335 = vmatprep.subr.mxu0 0.0
  %336 = vmatpush1.msra.mxu0 0.0
  %337 = vmatprep.subr.mxu0 0.0
  %338 = vmatpush1.msra.mxu0 0.0
  %339 = vmatprep.subr.mxu0 0.0
  %340 = vmatpush1.msra.mxu0 0.0
  %341 = vmatprep.subr.mxu0 0.0
  %342 = vmatpush1.msra.mxu0 0.0
  %343 = vmatprep.subr.mxu0 0.0
  %344 = vmatpush1.msra.mxu0 0.0
  %345 = vmatprep.subr.mxu0 0.0
  %346 = vmatpush1.msra.mxu0 0.0
  %347 = vmatprep.subr.mxu0 0.0
  %348 = vmatpush1.msra.mxu0 0.0
  %349 = vmatprep.subr.mxu0 0.0
  %350 = vmatpush1.msra.mxu0 0.0
  %351 = vmatprep.subr.mxu0 0.0
  %352 = vmatpush1.msra.mxu0 0.0
  %353 = vmatprep.subr.mxu0 0.0
  %354 = vmatpush1.msra.mxu0 0.0
  %355 = vmatprep.subr.mxu0 0.0
  %356 = vmatpush1.msra.mxu0 0.0
  %357 = vmatprep.subr.mxu0 0.0
  %358 = vmatpush1.msra.mxu0 0.0
  %359 = vmatprep.subr.mxu0 0.0
  %360 = vmatpush1.msra.mxu0 0.0
  %361 = vmatprep.subr.mxu0 0.0
  %362 = vmatpush1.msra.mxu0 0.0
  %363 = vmatprep.subr.mxu0 0.0
  %364 = vmatpush1.msra.mxu0 0.0
  %365 = vmatprep.subr.mxu0 0.0
  %366 = vmatpush1.msra.mxu0 0.0
  %367 = vmatprep.subr.mxu0 0.0
  %368 = vmatpush1.msra.mxu0 0.0
  %369 = vmatprep.subr.mxu0 0.0
  %370 = vmatpush1.msra.mxu0 0.0
  %371 = vmatprep.subr.mxu0 0.0
  %372 = vmatpush1.msra.mxu0 0.0
  %373 = vmatprep.subr.mxu0 0.0
  %374 = vmatpush1.msra.mxu0 0.0
  %375 = vmatprep.mubr.f32.mxu0 0.0
  %376 = vmatmul.mubr.f32.gmra.mrb[0].mxu0 %v309
  %v377 = vpop.f32.mrb[0].mxu0
  %v378 = vadd.f32 %v305, %v377
  %v379 = vpop.f32.mrb[0].mxu0
  %380 = vdwg.mxu0
  %vm381 = vcmask 287744
  %382 = vst.msk [vmem:[%s9] sm:$0x3] %vm381, %v378
  // Predicated region
  $region38: #{_lambda_.1} parent=0 // pred_check
    _
  $region39: #{_lambda_.1} parent=0 // pred_check_branch
    %384 = sbr.rel (0) target = $region41
  $region40: #{_lambda_.1} parent=0 // pred_region
    _
  $region41: #{_lambda_.1} parent=0 // pred_fallthru
    _
  // Predicated region
  $region42: #{_lambda_.1} parent=0 // pred_check
    _
  $region43: #{_lambda_.1} parent=0 // pred_check_branch
    %386 = sbr.rel (0) target = $region45
  $region44: #{_lambda_.1} parent=0 // pred_region
    _
  $region45: #{_lambda_.1} parent=0 // pred_fallthru
    _

</llo_original>
